<compile_context>
chip_gen: v5e
topology: v5e:2x2
jax: 0.10.0
libtpu: 0.0.40
codegen_flags: <defaults>
</compile_context>

<pallas_src>
import functools

import jax
import jax.numpy as jnp
from jax.experimental import pallas as pl
from jax.experimental.pallas import tpu as pltpu

LANES = 128  # TPU lane width; hidden/output widths are padded to this.
SUBLANES = 8


def _round_up(n, m):
    return ((n + m - 1) // m) * m


def _mlp_kernel(x_ref, p_ref, o_ref, *, in_pad, h_pad):
    """Fused 3-layer MLP on one (TB, in_pad) batch tile.

    p_ref is the packed parameter slab (rows, 128):
      [w1 | b1 | w2 | b2 | w3 | b3] with 8-row-aligned section offsets.
    """
    r_w1 = 0
    r_b1 = r_w1 + in_pad
    r_w2 = r_b1 + SUBLANES
    r_b2 = r_w2 + h_pad
    r_w3 = r_b2 + SUBLANES
    r_b3 = r_w3 + h_pad

    x = x_ref[...]                                  # (TB, in_pad) f32

    w1 = p_ref[r_w1:r_w1 + in_pad, :]               # (in_pad, 128)
    b1 = p_ref[r_b1:r_b1 + 1, :]                    # (1, 128) broadcasts over TB
    w2 = p_ref[r_w2:r_w2 + h_pad, :]                # (128, 128)
    b2 = p_ref[r_b2:r_b2 + 1, :]
    w3 = p_ref[r_w3:r_w3 + h_pad, :]                # (128, 128)
    b3 = p_ref[r_b3:r_b3 + 1, :]

    h1 = jnp.dot(x, w1, preferred_element_type=jnp.float32) + b1
    h1 = jnp.maximum(h1, 0.0)
    h2 = jnp.dot(h1, w2, preferred_element_type=jnp.float32) + b2
    h2 = jnp.maximum(h2, 0.0)
    # Output stays f32 -> no extra cast pass; full (TB, 128) lane-dense store.
    o_ref[...] = jnp.dot(h2, w3, preferred_element_type=jnp.float32) + b3


def _pack_params(params, in_pad):
    """Concatenate all weights/biases into one zero-padded (rows, 128) f32 slab."""

    def pad2(a, rows, cols):
        a = jnp.asarray(a, jnp.float32)
        if a.ndim == 1:
            a = a.reshape(1, -1)
        return jnp.zeros((rows, cols), jnp.float32).at[: a.shape[0], : a.shape[1]].set(a)

    h_pad = LANES
    slab = jnp.concatenate(
        [
            pad2(params["w1"], in_pad, LANES),   # rows [0, in_pad)
            pad2(params["b1"], SUBLANES, LANES), # rows [in_pad, in_pad+8)
            pad2(params["w2"], h_pad, LANES),    # 128 rows
            pad2(params["b2"], SUBLANES, LANES),
            pad2(params["w3"], h_pad, LANES),    # 128 rows
            pad2(params["b3"], SUBLANES, LANES),
        ],
        axis=0,
    )
    return slab  # (in_pad + 8 + 128 + 8 + 128 + 8, 128); rows multiple of 8.


def flower_model_forward(x, params, block_batch=512):
    """Run the 3-layer MLP forward pass with a batch-tiled Pallas kernel.

    x: (B, input_features) float32
    params: dict with w1 (in,n), b1 (n,), w2 (n,n), b2 (n,), w3 (n,out), b3 (out,)
    returns: (B, output_features) float32 logits
    """
    B, in_f = x.shape
    out_f = params["w3"].shape[1]

    in_pad = max(SUBLANES, _round_up(in_f, SUBLANES))  # sublane-aligned feature width
    h_pad = LANES                                      # hidden (16) padded to lane width

    slab = _pack_params(params, in_pad)

    # Batch tile: up to `block_batch` rows (f32). VMEM footprint per step is
    # tiny (x tile TB*in_pad*4 + out tile TB*128*4, double-buffered, plus a
    # ~145 KiB resident parameter slab) -> safe even on v7x (64 MiB VMEM).
    tb = min(_round_up(block_batch, SUBLANES), _round_up(B, SUBLANES))
    bp = _round_up(B, tb)

    xp = jnp.zeros((bp, in_pad), jnp.float32).at[:B, :in_f].set(
        x.astype(jnp.float32)
    )

    kernel = functools.partial(_mlp_kernel, in_pad=in_pad, h_pad=h_pad)

    out_padded = pl.pallas_call(
        kernel,
        out_shape=jax.ShapeDtypeStruct((bp, LANES), jnp.float32),
        grid=(bp // tb,),
        in_specs=[
            pl.BlockSpec((tb, in_pad), lambda i: (i, 0)),      # batch-tiled x
            pl.BlockSpec(slab.shape, lambda i: (0, 0)),        # VMEM-resident params
        ],
        out_specs=pl.BlockSpec((tb, LANES), lambda i: (i, 0)),  # lane-dense out
        compiler_params=pltpu.CompilerParams(
            dimension_semantics=("parallel",),
        ),
    )(xp, slab)

    return out_padded[:B, :out_f]


def init_params(key, input_features, output_features, neurons=16):
    """Deterministic init mimicking PyTorch nn.Linear default (U(-1/sqrt(fan_in), +))."""
    keys = jax.random.split(key, 6)

    def linear_init(kw, kb, fan_in, fan_out):
        bound = 1.0 / jnp.sqrt(jnp.float32(fan_in))
        w = jax.random.uniform(kw, (fan_in, fan_out), jnp.float32, -bound, bound)
        b = jax.random.uniform(kb, (fan_out,), jnp.float32, -bound, bound)
        return w, b

    w1, b1 = linear_init(keys[0], keys[1], input_features, neurons)
    w2, b2 = linear_init(keys[2], keys[3], neurons, neurons)
    w3, b3 = linear_init(keys[4], keys[5], neurons, output_features)
    return {"w1": w1, "b1": b1, "w2": w2, "b2": b2, "w3": w3, "b3": b3}


def reference_forward(x, params):
    """Pure-JAX reference for correctness check."""
    h = jnp.maximum(x @ params["w1"] + params["b1"], 0.0)
    h = jnp.maximum(h @ params["w2"] + params["b2"], 0.0)
    return h @ params["w3"] + params["b3"]


if __name__ == "__main__":
    # Iris: 4 input features, 3 classes, 16 hidden neurons.
    INPUT_FEATURES = 4
    OUTPUT_FEATURES = 3
    NEURONS = 16
    BATCH = 8

    key = jax.random.PRNGKey(0)
    kx, kp, kx2 = jax.random.split(key, 3)

    params = init_params(kp, INPUT_FEATURES, OUTPUT_FEATURES, NEURONS)

    # Small demo batch (single grid step).
    x = jax.random.normal(kx, (BATCH, INPUT_FEATURES), dtype=jnp.float32)
    out = jax.block_until_ready(flower_model_forward(x, params))
    ref = reference_forward(x, params)
    assert out.shape == (BATCH, OUTPUT_FEATURES), out.shape
    assert jnp.allclose(out, ref, atol=1e-4, rtol=1e-4), "mismatch vs reference (B=8)"

    # Larger, non-multiple batch to exercise the batch grid + padding path.
    x2 = jax.random.normal(kx2, (300, INPUT_FEATURES), dtype=jnp.float32)
    out2 = jax.block_until_ready(flower_model_forward(x2, params, block_batch=128))
    ref2 = reference_forward(x2, params)
    assert out2.shape == (300, OUTPUT_FEATURES), out2.shape
    assert jnp.allclose(out2, ref2, atol=1e-4, rtol=1e-4), "mismatch vs reference (B=300)"

    print("KERNEL_OK")
</pallas_src>

<mosaic_0001>
module attributes {stable_mosaic.version = 11 : i64} {
  func.func @_mlp_kernel(%arg0: i32, %arg1: memref<8x8xf32, #tpu.memory_space<vmem>>, %arg2: memref<288x128xf32, #tpu.memory_space<vmem>>, %arg3: memref<8x128xf32, #tpu.memory_space<vmem>>) attributes {dimension_semantics = [#tpu.dimension_semantics<parallel>], iteration_bounds = array<i64: 1>, scalar_prefetch = 0 : i64, scratch_operands = 0 : i64, tpu.core_type = #tpu.core_type<tc>, window_params = [{transform_indices = @transform_0, window_bounds = array<i64: 8, 8>}, {pipeline_mode = #tpu.pipeline_mode<synchronous>, transform_indices = @transform_1, window_bounds = array<i64: 288, 128>}, {transform_indices = @transform_2, window_bounds = array<i64: 8, 128>}]} {
    %c0 = arith.constant 0 : index
    %c0_0 = arith.constant 0 : index
    %0 = vector.load %arg1[%c0, %c0_0] : memref<8x8xf32, #tpu.memory_space<vmem>>, vector<8x8xf32>
    %c0_1 = arith.constant 0 : index
    %c0_2 = arith.constant 0 : index
    %1 = vector.load %arg2[%c0_1, %c0_2] : memref<288x128xf32, #tpu.memory_space<vmem>>, vector<8x128xf32>
    %c8 = arith.constant 8 : index
    %c0_3 = arith.constant 0 : index
    %2 = vector.load %arg2[%c8, %c0_3] : memref<288x128xf32, #tpu.memory_space<vmem>>, vector<1x128xf32>
    %c16 = arith.constant 16 : index
    %c0_4 = arith.constant 0 : index
    %3 = vector.load %arg2[%c16, %c0_4] : memref<288x128xf32, #tpu.memory_space<vmem>>, vector<128x128xf32>
    %c144 = arith.constant 144 : index
    %c0_5 = arith.constant 0 : index
    %4 = vector.load %arg2[%c144, %c0_5] : memref<288x128xf32, #tpu.memory_space<vmem>>, vector<1x128xf32>
    %c152 = arith.constant 152 : index
    %c0_6 = arith.constant 0 : index
    %5 = vector.load %arg2[%c152, %c0_6] : memref<288x128xf32, #tpu.memory_space<vmem>>, vector<128x128xf32>
    %c280 = arith.constant 280 : index
    %c0_7 = arith.constant 0 : index
    %6 = vector.load %arg2[%c280, %c0_7] : memref<288x128xf32, #tpu.memory_space<vmem>>, vector<1x128xf32>
    %cst = arith.constant dense<0.000000e+00> : vector<8x128xf32>
    %7 = tpu.matmul %0, %1, %cst {dimension_numbers = #tpu.dot_dimension_numbers<[1], [0], [0], [1], [0, 0, 1, 1], [], []>} : vector<8x8xf32>, vector<8x128xf32>, vector<8x128xf32> -> vector<8x128xf32>
    %8 = vector.broadcast %2 : vector<1x128xf32> to vector<8x128xf32>
    %9 = arith.addf %7, %8 : vector<8x128xf32>
    %cst_8 = arith.constant 0.000000e+00 : f32
    %10 = vector.broadcast %cst_8 : f32 to vector<8x128xf32>
    %11 = arith.maximumf %9, %10 : vector<8x128xf32>
    %cst_9 = arith.constant dense<0.000000e+00> : vector<8x128xf32>
    %12 = tpu.matmul %11, %3, %cst_9 {dimension_numbers = #tpu.dot_dimension_numbers<[1], [0], [0], [1], [0, 0, 1, 1], [], []>} : vector<8x128xf32>, vector<128x128xf32>, vector<8x128xf32> -> vector<8x128xf32>
    %13 = vector.broadcast %4 : vector<1x128xf32> to vector<8x128xf32>
    %14 = arith.addf %12, %13 : vector<8x128xf32>
    %cst_10 = arith.constant 0.000000e+00 : f32
    %15 = vector.broadcast %cst_10 : f32 to vector<8x128xf32>
    %16 = arith.maximumf %14, %15 : vector<8x128xf32>
    %cst_11 = arith.constant dense<0.000000e+00> : vector<8x128xf32>
    %17 = tpu.matmul %16, %5, %cst_11 {dimension_numbers = #tpu.dot_dimension_numbers<[1], [0], [0], [1], [0, 0, 1, 1], [], []>} : vector<8x128xf32>, vector<128x128xf32>, vector<8x128xf32> -> vector<8x128xf32>
    %18 = vector.broadcast %6 : vector<1x128xf32> to vector<8x128xf32>
    %19 = arith.addf %17, %18 : vector<8x128xf32>
    %c0_12 = arith.constant 0 : index
    %c0_13 = arith.constant 0 : index
    %20 = vector.load %arg3[%c0_12, %c0_13] : memref<8x128xf32, #tpu.memory_space<vmem>>, vector<8x128xf32>
    tpu.vector_store %arg3[%c0_12, %c0_13], %19 {strides = array<i32>} : memref<8x128xf32, #tpu.memory_space<vmem>>, vector<8x128xf32>,
    return
  }
  func.func @transform_0(%arg0: i32) -> (i32, i32) {
    %c0_i32 = arith.constant 0 : i32
    %c0_i32_0 = arith.constant 0 : i32
    return %arg0, %c0_i32 : i32, i32
  }
  func.func @transform_1(%arg0: i32) -> (i32, i32) {
    %c0_i32 = arith.constant 0 : i32
    %c0_i32_0 = arith.constant 0 : i32
    %c0_i32_1 = arith.constant 0 : i32
    return %c0_i32, %c0_i32_0 : i32, i32
  }
  func.func @transform_2(%arg0: i32) -> (i32, i32) {
    %c0_i32 = arith.constant 0 : i32
    %c0_i32_0 = arith.constant 0 : i32
    return %arg0, %c0_i32 : i32, i32
  }
}

</mosaic_0001>

<llo_original>
// kernel: tpu_custom_call.1
$region0: #{tpu_custom_call.1}
  #allocation0 [shape = 'u32[]', space=smem, size = 0x4, offset = 0x4, fixed_abs, tag = 'smem constant byte address 0x4 - core index']
  #allocation1 [shape = 'u32[72,128]{1,0:T(1,128)}', space=vmem, size = 0x9000, scoped, tag = 'internal scratch']
  %s0 = inlined_call_operand.hbm [shape: f32[8,8], index: 0, kind: input, shape index: {}]
  %s1 = inlined_call_operand.hbm [shape: f32[288,128], index: 1, kind: input, shape index: {}]
  %s2 = inlined_call_operand.hbm [shape: f32[8,128], index: 2, kind: output, shape index: {}]
  %s3 = sld [smem:[#allocation0]]
  $region26: #{tpu_custom_call.1} parent=0
    _
  %s5 = ssub.s32 1, %s3
  %s6 = scalar_select 0, %s5, %s3
  $region1: #{tpu_custom_call.1} parent=0
    #allocation2 [shape = 'u8[4096]{0}', space=vmem, size = 0x1000, scoped, tag = 'input window, operand 0, single buffered']
    #allocation3 [shape = 's32[1]{0}', space=sflag, size = 0x4, scoped, tag = 'scoped memory for tpu_custom_call.1']
    #allocation4 [shape = 's32[1]{0}', space=sflag, size = 0x4, scoped, tag = 'scoped memory for tpu_custom_call.1']
    #allocation5 [shape = 'u8[147456]{0}', space=vmem, size = 0x24000, scoped, tag = 'input window, operand 1, single buffered']
    #allocation6 [shape = 's32[1]{0}', space=sflag, size = 0x4, scoped, tag = 'scoped memory for tpu_custom_call.1']
    #allocation7 [shape = 'u8[4096]{0}', space=vmem, size = 0x1000, scoped, tag = 'output window, operand 0, single buffered']
    %7 = vsyncpa [#allocation3], 0
    %8 = vsyncpa [#allocation6], 0
    %9 = vsyncpa [#allocation4], 0
    // Predicated region
    $region2: #{tpu_custom_call.1} parent=1 // pred_check
      _
    $region3: #{tpu_custom_call.1} parent=1 // pred_check_branch
      %11 = sbr.rel (0) target = $region5
    $region4: #{tpu_custom_call.1} parent=1 // pred_region
      %13 = vsyncadd [#allocation3], 0
      %s15 = sshll.u32 %s0, 4
      %s16 = int_to_ptr.hbm [resolvable:$true] %s15
      %s17 = sshll.u32 [#allocation2], 4
      %s18 = int_to_ptr.vmem [resolvable:$true] %s17
      %20 = dma.hbm_to_vmem [thread:$0]  %s16, 128, %s18, [#allocation3]
    $region5: #{tpu_custom_call.1} parent=1 // pred_fallthru
      _
    // Predicated region
    $region6: #{tpu_custom_call.1} parent=1 // pred_check
      _
    $region7: #{tpu_custom_call.1} parent=1 // pred_check_branch
      %22 = sbr.rel (0) target = $region9
    $region8: #{tpu_custom_call.1} parent=1 // pred_region
      %24 = vsyncadd [#allocation6], 0
      %s25 = sshll.u32 %s1, 4
      %s26 = int_to_ptr.hbm [resolvable:$true] %s25
      %s27 = sshll.u32 [#allocation5], 4
      %s28 = int_to_ptr.vmem [resolvable:$true] %s27
      %33 = dma.hbm_to_vmem [thread:$0]  %s26, 4608, %s28, [#allocation6], 128, 128, 8
    $region9: #{tpu_custom_call.1} parent=1 // pred_fallthru
      _
    // Predicated region
    $region10: #{tpu_custom_call.1} parent=1 // pred_check
      _
    $region11: #{tpu_custom_call.1} parent=1 // pred_check_branch
      %35 = sbr.rel (0) target = $region13
    $region12: #{tpu_custom_call.1} parent=1 // pred_region
      %37 = dma.done [#allocation3], 128
    $region13: #{tpu_custom_call.1} parent=1 // pred_fallthru
      _
    // Predicated region
    $region14: #{tpu_custom_call.1} parent=1 // pred_check
      _
    $region15: #{tpu_custom_call.1} parent=1 // pred_check_branch
      %39 = sbr.rel (0) target = $region17
    $region16: #{tpu_custom_call.1} parent=1 // pred_region
      %41 = dma.done [#allocation6], 4608
    $region17: #{tpu_custom_call.1} parent=1 // pred_fallthru
      _
    %v42 = vld [vmem:[#allocation2] sm:$0xff]
    %v43 = vld [vmem:[#allocation5] sm:$0xff]
    %v44 = vld [vmem:[#allocation5 + $0x8] sm:$0x1]
    %v45 = vld [vmem:[#allocation5 + $0x10] sm:$0xff]
    %v46 = vld [vmem:[#allocation5 + $0x18] sm:$0xff]
    %v47 = vld [vmem:[#allocation5 + $0x20] sm:$0xff]
    %v48 = vld [vmem:[#allocation5 + $0x28] sm:$0xff]
    %v49 = vld [vmem:[#allocation5 + $0x30] sm:$0xff]
    %v50 = vld [vmem:[#allocation5 + $0x38] sm:$0xff]
    %v51 = vld [vmem:[#allocation5 + $0x40] sm:$0xff]
    %v52 = vld [vmem:[#allocation5 + $0x48] sm:$0xff]
    %v53 = vld [vmem:[#allocation5 + $0x50] sm:$0xff]
    %v54 = vld [vmem:[#allocation5 + $0x58] sm:$0xff]
    %v55 = vld [vmem:[#allocation5 + $0x60] sm:$0xff]
    %v56 = vld [vmem:[#allocation5 + $0x68] sm:$0xff]
    %v57 = vld [vmem:[#allocation5 + $0x70] sm:$0xff]
    %v58 = vld [vmem:[#allocation5 + $0x78] sm:$0xff]
    %v59 = vld [vmem:[#allocation5 + $0x80] sm:$0xff]
    %v60 = vld [vmem:[#allocation5 + $0x88] sm:$0xff]
    %v61 = vld [vmem:[#allocation5 + $0x90] sm:$0x1]
    %v62 = vld [vmem:[#allocation5 + $0x98] sm:$0xff]
    %v63 = vld [vmem:[#allocation5 + $0xa0] sm:$0xff]
    %v64 = vld [vmem:[#allocation5 + $0xa8] sm:$0xff]
    %v65 = vld [vmem:[#allocation5 + $0xb0] sm:$0xff]
    %v66 = vld [vmem:[#allocation5 + $0xb8] sm:$0xff]
    %v67 = vld [vmem:[#allocation5 + $0xc0] sm:$0xff]
    %v68 = vld [vmem:[#allocation5 + $0xc8] sm:$0xff]
    %v69 = vld [vmem:[#allocation5 + $0xd0] sm:$0xff]
    %v70 = vld [vmem:[#allocation5 + $0xd8] sm:$0xff]
    %v71 = vld [vmem:[#allocation5 + $0xe0] sm:$0xff]
    %v72 = vld [vmem:[#allocation5 + $0xe8] sm:$0xff]
    %v73 = vld [vmem:[#allocation5 + $0xf0] sm:$0xff]
    %v74 = vld [vmem:[#allocation5 + $0xf8] sm:$0xff]
    %v75 = vld [vmem:[#allocation5 + $0x100] sm:$0xff]
    %v76 = vld [vmem:[#allocation5 + $0x108] sm:$0xff]
    %v77 = vld [vmem:[#allocation5 + $0x110] sm:$0xff]
    %v78 = vld [vmem:[#allocation5 + $0x118] sm:$0x1]
    %v79 = vperm.slane %v44, 0
    %vm80 = vcmask 64512
    %v82 = vsel %vm80, %v42, 0
    %84 = vmatpush.msra.mxu0 0.0
    %85 = vmatpush.msra.mxu0 0.0
    %86 = vmatpush.msra.mxu0 0.0
    %87 = vmatpush.msra.mxu0 0.0
    %88 = vmatpush.msra.mxu0 0.0
    %89 = vmatpush.msra.mxu0 0.0
    %90 = vmatpush.msra.mxu0 0.0
    %91 = vmatpush.msra.mxu0 0.0
    %92 = vmatpush.msra.mxu0 0.0
    %93 = vmatpush.msra.mxu0 0.0
    %94 = vmatpush.msra.mxu0 0.0
    %95 = vmatpush.msra.mxu0 0.0
    %96 = vmatpush.msra.mxu0 0.0
    %97 = vmatpush.msra.mxu0 0.0
    %98 = vmatpush.msra.mxu0 0.0
    %99 = vmatpush.msra.mxu0 %v43
    %100 = vmatmul.f32.gmra.mxu0 %v82
    %v101 = vpop.f32.mrf.mxu0
    %v102 = vadd.f32 %v79, %v101
    %103 = vdwg.mxu0
    %v104 = vmax.f32 %v102, 0.0
    %v105 = vperm.slane %v61, 0
    %106 = vmatpush.msra.mxu0 %v60
    %107 = vmatpush.msra.mxu0 %v59
    %108 = vmatpush.msra.mxu0 %v58
    %109 = vmatpush.msra.mxu0 %v57
    %110 = vmatpush.msra.mxu0 %v56
    %111 = vmatpush.msra.mxu0 %v55
    %112 = vmatpush.msra.mxu0 %v54
    %113 = vmatpush.msra.mxu0 %v53
    %114 = vmatpush.msra.mxu0 %v52
    %115 = vmatpush.msra.mxu0 %v51
    %116 = vmatpush.msra.mxu0 %v50
    %117 = vmatpush.msra.mxu0 %v49
    %118 = vmatpush.msra.mxu0 %v48
    %119 = vmatpush.msra.mxu0 %v47
    %120 = vmatpush.msra.mxu0 %v46
    %121 = vmatpush.msra.mxu0 %v45
    %122 = vmatmul.f32.gmra.mxu0 %v104
    %v123 = vpop.f32.mrf.mxu0
    %v124 = vadd.f32 %v105, %v123
    %125 = vdwg.mxu0
    %v126 = vmax.f32 %v124, 0.0
    %v127 = vperm.slane %v78, 0
    %128 = vmatpush.msra.mxu0 %v77
    %129 = vmatpush.msra.mxu0 %v76
    %130 = vmatpush.msra.mxu0 %v75
    %131 = vmatpush.msra.mxu0 %v74
    %132 = vmatpush.msra.mxu0 %v73
    %133 = vmatpush.msra.mxu0 %v72
    %134 = vmatpush.msra.mxu0 %v71
    %135 = vmatpush.msra.mxu0 %v70
    %136 = vmatpush.msra.mxu0 %v69
    %137 = vmatpush.msra.mxu0 %v68
    %138 = vmatpush.msra.mxu0 %v67
    %139 = vmatpush.msra.mxu0 %v66
    %140 = vmatpush.msra.mxu0 %v65
    %141 = vmatpush.msra.mxu0 %v64
    %142 = vmatpush.msra.mxu0 %v63
    %143 = vmatpush.msra.mxu0 %v62
    %144 = vmatmul.f32.gmra.mxu0 %v126
    %v145 = vpop.f32.mrf.mxu0
    %v146 = vadd.f32 %v127, %v145
    %147 = vdwg.mxu0
    %148 = vst [vmem:[#allocation7] sm:$0xff] %v146
    // Predicated region
    $region18: #{tpu_custom_call.1} parent=1 // pred_check
      _
    $region19: #{tpu_custom_call.1} parent=1 // pred_check_branch
      %150 = sbr.rel (0) target = $region21
    $region20: #{tpu_custom_call.1} parent=1 // pred_region
      %152 = vsyncadd [#allocation4], 0
      %s154 = sshll.u32 [#allocation7], 4
      %s155 = int_to_ptr.vmem [resolvable:$true] %s154
      %s156 = sshll.u32 %s2, 4
      %s157 = int_to_ptr.hbm [resolvable:$true] %s156
      %159 = dma.vmem_to_hbm [thread:$0]  %s155, 128, %s157, [#allocation4]
    $region21: #{tpu_custom_call.1} parent=1 // pred_fallthru
      _
    // Predicated region
    $region22: #{tpu_custom_call.1} parent=1 // pred_check
      _
    $region23: #{tpu_custom_call.1} parent=1 // pred_check_branch
      %161 = sbr.rel (0) target = $region25
    $region24: #{tpu_custom_call.1} parent=1 // pred_region
      %163 = dma.done [#allocation4], 128
    $region25: #{tpu_custom_call.1} parent=1 // pred_fallthru
      _
    %164 = vsyncpa [#allocation3], 1
    %165 = vsyncpa [#allocation6], 1
    %166 = vsyncpa [#allocation4], 1

</llo_original>
